<compile_context>
chip_gen: v6e
topology: v6e:2x2x1
jax: 0.10.0
libtpu: 0.0.40
codegen_flags: <defaults>
</compile_context>

<pallas_src>
import math

import jax
import jax.numpy as jnp
from jax.experimental import pallas as pl
from jax.experimental.pallas import tpu as pltpu


# ----------------------------- Pallas kernel -----------------------------

def _lff_kernel(p_ref, w_ref, b_ref, o_ref):
    # p_ref: [1, K, TM]  bf16 im2col patches for one image (lane-dense along M)
    # w_ref: [O, K]      bf16 conv weight with pi already folded in (resident)
    # b_ref: [O, 1]      f32 conv bias (resident)
    # o_ref: [1, O, TM]  output tile (bf16 by default), lane-dense along M
    acc = jnp.dot(w_ref[...], p_ref[0], preferred_element_type=jnp.float32)
    # sin evaluated in f32 (accuracy; v5e has no bf16 VALU), stored narrow.
    o_ref[0] = jnp.sin(acc + b_ref[...]).astype(o_ref.dtype)


def _round_up(x, m):
    return ((x + m - 1) // m) * m


def _pick_tile_m(m_pad, n_batch, tm_cap=8192, min_steps=8, tm_floor=512):
    """Pick the M tile: a 128-multiple divisor of m_pad, as large as possible
    (big DMAs, amortized per-step overhead), but keeping >= min_steps total grid
    steps when that can be done with tiles >= tm_floor, so the v7x 2-TensorCore
    'parallel' sharding stays load-balanced."""
    divs = [d for d in range(128, m_pad + 1, 128) if m_pad % d == 0 and d <= tm_cap]
    if not divs:
        return 128
    for d in sorted(divs, reverse=True):
        if d >= tm_floor and n_batch * (m_pad // d) >= min_steps:
            return d
    return max(divs)


def _lff_matmul_sin(patches, w_ok, b_o1, out_dtype, tm_cap=8192):
    """patches: [N, K, M_pad] bf16 (M_pad % 128 == 0), w_ok: [O, K] bf16 (pi folded),
    b_o1: [O, 1] f32.  Returns [N, O, M_pad] = sin(w @ p + b) in out_dtype."""
    n, k, m_pad = patches.shape
    o = w_ok.shape[0]
    tm = _pick_tile_m(m_pad, n, tm_cap)
    grid = (n, m_pad // tm)

    cost = pl.CostEstimate(
        flops=2 * o * k * n * m_pad,
        transcendentals=o * n * m_pad,
        bytes_accessed=(patches.size * patches.dtype.itemsize
                        + w_ok.size * w_ok.dtype.itemsize
                        + b_o1.size * b_o1.dtype.itemsize
                        + n * o * m_pad * jnp.dtype(out_dtype).itemsize),
    )

    return pl.pallas_call(
        _lff_kernel,
        out_shape=jax.ShapeDtypeStruct((n, o, m_pad), out_dtype),
        grid=grid,
        in_specs=[
            pl.BlockSpec((1, k, tm), lambda b, m: (b, 0, m)),   # patches: streamed per tile
            pl.BlockSpec((o, k), lambda b, m: (0, 0)),          # weight: resident
            pl.BlockSpec((o, 1), lambda b, m: (0, 0)),          # bias:   resident
        ],
        out_specs=pl.BlockSpec((1, o, tm), lambda b, m: (b, 0, m)),
        compiler_params=pltpu.CompilerParams(
            dimension_semantics=("parallel", "parallel"),       # shard across TCs (v7x)
            vmem_limit_bytes=48 * 1024 * 1024,                  # under v7x 64 MiB/TC ceiling
        ),
        cost_estimate=cost,
    )(patches, w_ok, b_o1)


# ------------------------------ LFF wrapper ------------------------------

def im2col_nkm(x, kernel_dim, stride, m_pad):
    """x: [N, C, H, W] f32 -> bf16 patches [N, C*KH*KW, m_pad] (lane-padded).
    Feature (row) order is (C, KH, KW), matching PyTorch conv weight
    (O, C, KH, KW).reshape(O, -1).  Gather + pad + bf16 convert fuse into a
    single XLA pass producing exactly the kernel's input layout."""
    n, c, h, w = x.shape
    kh = kw = kernel_dim
    oh = (h - kh) // stride + 1
    ow = (w - kw) // stride + 1
    cols = []
    for i in range(kh):
        for j in range(kw):
            cols.append(x[:, :, i:i + stride * oh:stride, j:j + stride * ow:stride])
    p = jnp.stack(cols, axis=2)                      # [N, C, KH*KW, OH, OW]
    p = p.reshape(n, c * kh * kw, oh * ow)           # [N, K, M]
    p = p.astype(jnp.bfloat16)                       # halve HBM patch traffic
    if m_pad > oh * ow:
        p = jnp.pad(p, ((0, 0), (0, 0), (0, m_pad - oh * ow)))
    return p, oh, ow


def init_lff_params(key, input_feats, output_feats, kernel_dim, scale=1.0):
    """Deterministic init matching the PyTorch __init__ distributions."""
    w_key, b_key = jax.random.split(key)
    bound = scale / (input_feats * kernel_dim * kernel_dim)
    weight = jax.random.uniform(
        w_key, (output_feats, input_feats, kernel_dim, kernel_dim),
        dtype=jnp.float32, minval=-bound, maxval=bound)
    bias = jax.random.uniform(
        b_key, (output_feats,), dtype=jnp.float32, minval=-1.0, maxval=1.0)
    return weight, bias


def lff_forward(x, weight, bias, kernel_dim, stride, out_dtype=jnp.bfloat16):
    """x: [N, C, H, W] (NCHW, like PyTorch).  Returns [N, O, OH, OW] in out_dtype.

    conv(pi * x) == (pi * W) @ patches + b   (bias is NOT scaled by pi),
    so pi is folded into the tiny weight, never into the big activation stream.
    The kernel emits [N, O, OH*OW] directly, so no post-kernel transpose; the
    depad slice below is elided whenever OH*OW is already a multiple of 128."""
    n, c, h, w = x.shape
    o = weight.shape[0]
    k = c * kernel_dim * kernel_dim
    oh = (h - kernel_dim) // stride + 1
    ow = (w - kernel_dim) // stride + 1
    m = oh * ow
    m_pad = _round_up(m, 128)

    patches, _, _ = im2col_nkm(x, kernel_dim, stride, m_pad)               # [N, K, m_pad]
    w_pi = (weight.reshape(o, k) * jnp.float32(math.pi)).astype(jnp.bfloat16)
    b2 = bias.astype(jnp.float32).reshape(o, 1)

    out = _lff_matmul_sin(patches, w_pi, b2, out_dtype)                    # [N, O, m_pad]
    return out[:, :, :m].reshape(n, o, oh, ow)


# ------------------------------ reference ------------------------------

def lff_reference(x, weight, bias, kernel_dim, stride):
    y = jax.lax.conv_general_dilated(
        jnp.float32(math.pi) * x.astype(jnp.float32),
        weight,
        window_strides=(stride, stride),
        padding="VALID",
        dimension_numbers=("NCHW", "OIHW", "NCHW"),
    ) + bias.reshape(1, -1, 1, 1)
    return jnp.sin(y)


# -------------------------------- main --------------------------------

if __name__ == "__main__":
    key = jax.random.PRNGKey(0)
    k_x, k_p = jax.random.split(key)

    # Small shapes consistent with the module: Conv2d(4, 32, kernel=4, stride=2)
    N, C, H, W = 2, 4, 16, 16
    O, KDIM, STRIDE = 32, 4, 2

    x = jax.random.normal(k_x, (N, C, H, W), dtype=jnp.float32)
    weight, bias = init_lff_params(k_p, C, O, KDIM, scale=1.0)

    out = lff_forward(x, weight, bias, KDIM, STRIDE)
    out = jax.block_until_ready(out)

    ref = lff_reference(x, weight, bias, KDIM, STRIDE)
    OH = (H - KDIM) // STRIDE + 1
    assert out.shape == ref.shape == (N, O, OH, OH)
    # bf16 patches + bf16 weights into the MXU (f32 accumulation) and bf16 output of
    # a [-1, 1]-bounded sin: worst-case abs error well under 2.5e-2.
    max_err = float(jnp.max(jnp.abs(out.astype(jnp.float32) - ref)))
    assert max_err < 2.5e-2, max_err

    print("KERNEL_OK")
</pallas_src>

<mosaic_0001>
module attributes {stable_mosaic.version = 11 : i64} {
  func.func @_lff_kernel(%arg0: i32, %arg1: i32, %arg2: memref<1x64x128xbf16, #tpu.memory_space<vmem>>, %arg3: memref<32x64xbf16, #tpu.memory_space<vmem>>, %arg4: memref<32x1xf32, #tpu.memory_space<vmem>>, %arg5: memref<1x32x128xbf16, #tpu.memory_space<vmem>>) attributes {dimension_semantics = [#tpu.dimension_semantics<parallel>, #tpu.dimension_semantics<parallel>], iteration_bounds = array<i64: 2, 1>, scalar_prefetch = 0 : i64, scratch_operands = 0 : i64, tpu.core_type = #tpu.core_type<tc>, window_params = [{transform_indices = @transform_0, window_bounds = array<i64: 1, 64, 128>}, {pipeline_mode = #tpu.pipeline_mode<synchronous>, transform_indices = @transform_1, window_bounds = array<i64: 32, 64>}, {pipeline_mode = #tpu.pipeline_mode<synchronous>, transform_indices = @transform_2, window_bounds = array<i64: 32, 1>}, {transform_indices = @transform_3, window_bounds = array<i64: 1, 32, 128>}]} {
    %c0 = arith.constant 0 : index
    %c0_0 = arith.constant 0 : index
    %0 = vector.load %arg3[%c0, %c0_0] : memref<32x64xbf16, #tpu.memory_space<vmem>>, vector<32x64xbf16>
    %c0_1 = arith.constant 0 : index
    %c0_2 = arith.constant 0 : index
    %c0_3 = arith.constant 0 : index
    %1 = vector.load %arg2[%c0_1, %c0_2, %c0_3] : memref<1x64x128xbf16, #tpu.memory_space<vmem>>, vector<1x64x128xbf16>
    %2 = vector.shape_cast %1 : vector<1x64x128xbf16> to vector<64x128xbf16>
    %cst = arith.constant dense<0.000000e+00> : vector<32x128xf32>
    %3 = tpu.matmul %0, %2, %cst {dimension_numbers = #tpu.dot_dimension_numbers<[1], [0], [0], [1], [0, 0, 1, 1], [], []>} : vector<32x64xbf16>, vector<64x128xbf16>, vector<32x128xf32> -> vector<32x128xf32>
    %c0_4 = arith.constant 0 : index
    %c0_5 = arith.constant 0 : index
    %4 = vector.load %arg4[%c0_4, %c0_5] : memref<32x1xf32, #tpu.memory_space<vmem>>, vector<32x1xf32>
    %5 = vector.broadcast %4 : vector<32x1xf32> to vector<32x128xf32>
    %6 = arith.addf %3, %5 : vector<32x128xf32>
    %7 = math.sin %6 : vector<32x128xf32>
    %8 = arith.truncf %7 : vector<32x128xf32> to vector<32x128xbf16>
    %c0_6 = arith.constant 0 : index
    %c0_7 = arith.constant 0 : index
    %c0_8 = arith.constant 0 : index
    %9 = vector.load %arg5[%c0_6, %c0_7, %c0_8] : memref<1x32x128xbf16, #tpu.memory_space<vmem>>, vector<1x32x128xbf16>
    %10 = vector.shape_cast %9 : vector<1x32x128xbf16> to vector<32x128xbf16>
    %11 = vector.shape_cast %8 : vector<32x128xbf16> to vector<1x32x128xbf16>
    tpu.vector_store %arg5[%c0_6, %c0_7, %c0_8], %11 {strides = array<i32>} : memref<1x32x128xbf16, #tpu.memory_space<vmem>>, vector<1x32x128xbf16>,
    return
  }
  func.func @transform_0(%arg0: i32, %arg1: i32) -> (i32, i32, i32) {
    %c0_i32 = arith.constant 0 : i32
    %c0_i32_0 = arith.constant 0 : i32
    return %arg0, %c0_i32, %arg1 : i32, i32, i32
  }
  func.func @transform_1(%arg0: i32, %arg1: i32) -> (i32, i32) {
    %c0_i32 = arith.constant 0 : i32
    %c0_i32_0 = arith.constant 0 : i32
    %c0_i32_1 = arith.constant 0 : i32
    return %c0_i32, %c0_i32_0 : i32, i32
  }
  func.func @transform_2(%arg0: i32, %arg1: i32) -> (i32, i32) {
    %c0_i32 = arith.constant 0 : i32
    %c0_i32_0 = arith.constant 0 : i32
    %c0_i32_1 = arith.constant 0 : i32
    return %c0_i32, %c0_i32_0 : i32, i32
  }
  func.func @transform_3(%arg0: i32, %arg1: i32) -> (i32, i32, i32) {
    %c0_i32 = arith.constant 0 : i32
    %c0_i32_0 = arith.constant 0 : i32
    return %arg0, %c0_i32, %arg1 : i32, i32, i32
  }
}

</mosaic_0001>

<llo_original>
// kernel: tpu_custom_call.1
$region0: #{tpu_custom_call.1}
  #allocation0 [shape = 'u32[]', space=smem, size = 0x4, offset = 0x4, fixed_abs, tag = 'smem constant byte address 0x4 - core index']
  #allocation1 [shape = 'u32[144,128]{1,0:T(1,128)}', space=vmem, size = 0x12000, scoped, tag = 'internal scratch']
  %s0 = inlined_call_operand.hbm [shape: bf16[2,64,128], index: 0, kind: input, shape index: {}]
  %s1 = inlined_call_operand.vmem [shape: bf16[32,64], index: 1, kind: input, shape index: {}]
  %s2 = inlined_call_operand.vmem [shape: f32[32,1], index: 2, kind: input, shape index: {}]
  %s3 = inlined_call_operand.hbm [shape: bf16[2,32,128], index: 3, kind: output, shape index: {}]
  %s4 = sld [smem:[#allocation0]]
  $region49: #{tpu_custom_call.1} parent=0
    _
  %s6 = ssub.s32 1, %s4
  %s7 = scalar_select 0, %s6, %s4
  $region1: #{tpu_custom_call.1} parent=0
    #allocation2 [shape = 'u8[32768]{0}', space=vmem, size = 0x8000, scoped, tag = 'input window, operand 0']
    #allocation3 [shape = 's32[2]{0}', space=sflag, size = 0x8, scoped, tag = 'scoped memory for tpu_custom_call.1']
    #allocation4 [shape = 's32[2]{0}', space=sflag, size = 0x8, scoped, tag = 'scoped memory for tpu_custom_call.1']
    #allocation5 [shape = 'u8[16384]{0}', space=vmem, size = 0x4000, scoped, tag = 'output window, operand 0']
    %8 = vsyncpa [#allocation3], 0
    %s9 = scalar_lea.sflag [#allocation3], 1
    %10 = vsyncpa %s9, 0
    %11 = vsyncpa [#allocation4], 0
    %s12 = scalar_lea.sflag [#allocation4], 1
    %13 = vsyncpa %s12, 0
    loop: start=0, step=1, limit=4
    $region2: #{tpu_custom_call.1} parent=1 // loop_pre_header
      _
    $region3: #{tpu_custom_call.1} parent=1 // loop_header
      %s15 = sphi 0, %s19
      %p16 = scmp.ge.s32.totalorder %s15, 4
      %s22 = sphi 0, %s34
      %s23 = sphi 0, %s30
      %s24 = sphi 0, %s22
      %s25 = sphi 0, %s23
      %s26 = sphi 0, %s24
      %s27 = sphi 0, %s25
      %s39 = sphi 0, %s41
      %s42 = sphi 0, %s39
      %s43 = sphi 0, %s42
      %s59 = sphi 0, %s43
      %s63 = sphi 0, %s63
      %s65 = sphi 0, %s63
      %s66 = sphi 0, %s65
      %s80 = sphi 0, %s66
      %s84 = sphi 0, %s84
      %s86 = sphi 0, %s84
      %s87 = sphi 0, %s86
      %s101 = sphi 0, %s87
      %s109 = sphi 0, %s111
      %s112 = sphi 0, %s109
      %s113 = sphi 0, %s112
      %s129 = sphi 0, %s113
    $region4: #{tpu_custom_call.1} parent=1 // loop_header_branch
      %18 = sbr.rel (%p16) target = $region8
    $region5: #{tpu_custom_call.1} parent=1 // loop_body
      %s20 = ssub.s32 %s15, 1
      %s21 = ssub.s32 %s15, 2
      %s28 = sadd.s32 1, %s23
      %p29 = scmp.ge.s32.totalorder %s28, 1
      %s30 = scalar_select %p29, 0, %s28
      %s31 = sadd.s32 1, %s22
      %s32 = scalar_select %p29, %s31, %s22
      %p33 = scmp.ge.s32.totalorder %s32, 2
      %s34 = scalar_select %p33, 0, %s32
      %s35 = ssub.s32 %s22, %s34
      %s36 = ssub.s32 %s23, %s30
      %s37 = sor.u32 %s35, %s36
      %p38 = scmp.eq.s32.totalorder %s37, 0
      %s40 = sadd.s32 %s39, 1
      %s41 = scalar_select %p38, %s39, %s40
      %p44 = pneg %p38
      %p45 = scmp.eq.s32.totalorder %s15, 1
      %p46 = por %p44, %p45
      %p47 = scmp.ne.s32.totalorder %s39, %s42
      %p48 = scmp.eq.s32.totalorder %s15, 0
      %p49 = por %p47, %p48
      %p50 = scmp.ne.s32.totalorder %s39, %s42
      %p51 = scmp.eq.s32.totalorder %s20, 1
      %p52 = por %p50, %p51
      %p53 = scmp.ne.s32.totalorder %s42, %s43
      %p54 = scmp.eq.s32.totalorder %s20, 0
      %p55 = por %p53, %p54
      %p56 = scmp.ne.s32.totalorder %s42, %s43
      %p57 = scmp.eq.s32.totalorder %s21, 1
      %p58 = por %p56, %p57
      %p60 = scmp.ne.s32.totalorder %s43, %s59
      %p61 = scmp.eq.s32.totalorder %s21, 0
      %p62 = por %p60, %p61
      %s64 = sadd.s32 %s63, 1
      %p67 = scmp.eq.s32.totalorder %s15, 1
      %p68 = scmp.ne.s32.totalorder %s63, %s65
      %p69 = scmp.eq.s32.totalorder %s15, 0
      %p70 = por %p68, %p69
      %p71 = scmp.ne.s32.totalorder %s63, %s65
      %p72 = scmp.eq.s32.totalorder %s20, 1
      %p73 = por %p71, %p72
      %p74 = scmp.ne.s32.totalorder %s65, %s66
      %p75 = scmp.eq.s32.totalorder %s20, 0
      %p76 = por %p74, %p75
      %p77 = scmp.ne.s32.totalorder %s65, %s66
      %p78 = scmp.eq.s32.totalorder %s21, 1
      %p79 = por %p77, %p78
      %p81 = scmp.ne.s32.totalorder %s66, %s80
      %p82 = scmp.eq.s32.totalorder %s21, 0
      %p83 = por %p81, %p82
      %s85 = sadd.s32 %s84, 1
      %p88 = scmp.eq.s32.totalorder %s15, 1
      %p89 = scmp.ne.s32.totalorder %s84, %s86
      %p90 = scmp.eq.s32.totalorder %s15, 0
      %p91 = por %p89, %p90
      %p92 = scmp.ne.s32.totalorder %s84, %s86
      %p93 = scmp.eq.s32.totalorder %s20, 1
      %p94 = por %p92, %p93
      %p95 = scmp.ne.s32.totalorder %s86, %s87
      %p96 = scmp.eq.s32.totalorder %s20, 0
      %p97 = por %p95, %p96
      %p98 = scmp.ne.s32.totalorder %s86, %s87
      %p99 = scmp.eq.s32.totalorder %s21, 1
      %p100 = por %p98, %p99
      %p102 = scmp.ne.s32.totalorder %s87, %s101
      %p103 = scmp.eq.s32.totalorder %s21, 0
      %p104 = por %p102, %p103
      %s105 = ssub.s32 %s22, %s34
      %s106 = ssub.s32 %s23, %s30
      %s107 = sor.u32 %s105, %s106
      %p108 = scmp.eq.s32.totalorder %s107, 0
      %s110 = sadd.s32 %s109, 1
      %s111 = scalar_select %p108, %s109, %s110
      %p114 = pneg %p108
      %p115 = scmp.eq.s32.totalorder %s15, 1
      %p116 = por %p114, %p115
      %p117 = scmp.ne.s32.totalorder %s109, %s112
      %p118 = scmp.eq.s32.totalorder %s15, 0
      %p119 = por %p117, %p118
      %p120 = scmp.ne.s32.totalorder %s109, %s112
      %p121 = scmp.eq.s32.totalorder %s20, 1
      %p122 = por %p120, %p121
      %p123 = scmp.ne.s32.totalorder %s112, %s113
      %p124 = scmp.eq.s32.totalorder %s20, 0
      %p125 = por %p123, %p124
      %p126 = scmp.ne.s32.totalorder %s112, %s113
      %p127 = scmp.eq.s32.totalorder %s21, 1
      %p128 = por %p126, %p127
      %p130 = scmp.ne.s32.totalorder %s113, %s129
      %p131 = scmp.eq.s32.totalorder %s21, 0
      %p132 = por %p130, %p131
      %p133 = scmp.le.s32.totalorder 1, %s15
      %p134 = scmp.lt.s32.totalorder %s15, 3
      %p135 = pnand %p133, %p134
      %p136 = pneg %p135
      // Predicated region
      $region9: #{tpu_custom_call.1} parent=5 // pred_check
        _
      $region10: #{tpu_custom_call.1} parent=5 // pred_check_branch
        %138 = sbr.rel (%p135) target = $region12
      $region11: #{tpu_custom_call.1} parent=5 // pred_region
        %s139 = ssub.s32 %s15, 1
        // Predicated region
        $region13: #{tpu_custom_call.1} parent=11 // pred_check
          %p140 = pneg %p76
        $region14: #{tpu_custom_call.1} parent=11 // pred_check_branch
          %142 = sbr.rel (%p140) target = $region16
        $region15: #{tpu_custom_call.1} parent=11 // pred_region
          _
        $region16: #{tpu_custom_call.1} parent=11 // pred_fallthru
          _
        // Predicated region
        $region17: #{tpu_custom_call.1} parent=11 // pred_check
          %p143 = pneg %p97
        $region18: #{tpu_custom_call.1} parent=11 // pred_check_branch
          %145 = sbr.rel (%p143) target = $region20
        $region19: #{tpu_custom_call.1} parent=11 // pred_region
          _
        $region20: #{tpu_custom_call.1} parent=11 // pred_fallthru
          _
      $region12: #{tpu_custom_call.1} parent=5 // pred_fallthru
        _
      %p146 = scmp.lt.s32.totalorder %s15, 2
      // Predicated region
      $region21: #{tpu_custom_call.1} parent=5 // pred_check
        %p147 = pneg %p146
      $region22: #{tpu_custom_call.1} parent=5 // pred_check_branch
        %149 = sbr.rel (%p147) target = $region24
      $region23: #{tpu_custom_call.1} parent=5 // pred_region
        // Predicated region
        $region25: #{tpu_custom_call.1} parent=23 // pred_check
          %p150 = pneg %p49
        $region26: #{tpu_custom_call.1} parent=23 // pred_check_branch
          %152 = sbr.rel (%p150) target = $region28
        $region27: #{tpu_custom_call.1} parent=23 // pred_region
          %s153 = sand.u32 %s39, 1
          %s154 = scalar_lea.sflag [#allocation3], %s153
          %s155 = sand.u32 %s39, 1
          %s156 = smul.addr %s155, 32
          %s157 = scalar_lea.vmem [#allocation2], %s156
          %s159 = ssub.s32 512, 512
          %160 = vsyncadd %s154, %s159
          %s161 = smul.addr %s22, 8
          %s162 = sadd.s32 %s23, %s161
          %s163 = smul.addr %s162, 64
          %s164 = scalar_lea.hbm %s0, %s163
          %s165 = sshll.u32 %s157, 4
          %s166 = int_to_ptr.vmem [resolvable:$true] %s165
          %171 = dma.hbm_to_vmem [thread:$0]  %s164, 512, %s166, %s154, 64, 64, 4
        $region28: #{tpu_custom_call.1} parent=23 // pred_fallthru
          _
      $region24: #{tpu_custom_call.1} parent=5 // pred_fallthru
        _
      %p172 = scmp.le.s32.totalorder 1, %s15
      %p173 = scmp.lt.s32.totalorder %s15, 3
      %p174 = pnand %p172, %p173
      %p175 = pneg %p174
      // Predicated region
      $region29: #{tpu_custom_call.1} parent=5 // pred_check
        _
      $region30: #{tpu_custom_call.1} parent=5 // pred_check_branch
        %177 = sbr.rel (%p174) target = $region32
      $region31: #{tpu_custom_call.1} parent=5 // pred_region
        %s178 = ssub.s32 %s15, 1
        %s179 = sand.u32 %s42, 1
        %s180 = scalar_lea.sflag [#allocation3], %s179
        %s181 = sand.u32 %s42, 1
        %s182 = smul.addr %s181, 32
        %s183 = scalar_lea.vmem [#allocation2], %s182
        // Predicated region
        $region33: #{tpu_custom_call.1} parent=31 // pred_check
          %p184 = pneg %p55
        $region34: #{tpu_custom_call.1} parent=31 // pred_check_branch
          %186 = sbr.rel (%p184) target = $region36
        $region35: #{tpu_custom_call.1} parent=31 // pred_region
          %187 = dma.done %s180, 512
        $region36: #{tpu_custom_call.1} parent=31 // pred_fallthru
          _
        %s188 = sand.u32 %s42, 1
        %s189 = scalar_lea.sflag [#allocation3], %s188
        %s190 = sand.u32 %s42, 1
        %s191 = smul.addr %s190, 32
        %s192 = scalar_lea.vmem [#allocation2], %s191
        %p193 = pneg %p55
        %p194 = pneg %p52
        %p195 = pneg %p76
        %p196 = pneg %p73
        %p197 = pneg %p97
        %p198 = pneg %p94
        %p199 = pneg %p125
        %p200 = pneg %p122
        %s201 = sand.u32 %s112, 1
        %s202 = scalar_lea.sflag [#allocation4], %s201
        %s203 = sand.u32 %s112, 1
        %s204 = smul.addr %s203, 16
        %s205 = scalar_lea.vmem [#allocation5], %s204
        %v207 = vld [vmem:[%s1] sm:$0xf]
        %v208 = vld [vmem:[%s1 + $0x4] sm:$0xf]
        %v209 = vld [vmem:[%s1 + $0x8] sm:$0xf]
        %v210 = vld [vmem:[%s1 + $0xc] sm:$0xf]
        %v211 = vld [vmem:[%s183] sm:$0xf]
        %v212 = vld [vmem:[%s183 + $0x4] sm:$0xf]
        %v213 = vld [vmem:[%s183 + $0x8] sm:$0xf]
        %v214 = vld [vmem:[%s183 + $0xc] sm:$0xf]
        %v215 = vld [vmem:[%s183 + $0x10] sm:$0xf]
        %v216 = vld [vmem:[%s183 + $0x14] sm:$0xf]
        %v217 = vld [vmem:[%s183 + $0x18] sm:$0xf]
        %v218 = vld [vmem:[%s183 + $0x1c] sm:$0xf]
        %v219 = vld [vmem:[%s2] sm:$0xff]
        %v220 = vld [vmem:[%s2 + $0x8] sm:$0xff]
        %v221 = vld [vmem:[%s2 + $0x10] sm:$0xff]
        %v222 = vld [vmem:[%s2 + $0x18] sm:$0xff]
        %224 = vset.pattern.permute.xlu0 0
        %225 = vperm.xlu0 %224, %v219
        %v226 = vpop.permute.xlu0 %225
        %229 = vset.pattern.permute.xlu0 0
        %230 = vperm.xlu0 %229, %v220
        %v231 = vpop.permute.xlu0 %230
        %234 = vset.pattern.permute.xlu0 0
        %235 = vperm.xlu0 %234, %v221
        %v236 = vpop.permute.xlu0 %235
        %239 = vset.pattern.permute.xlu0 0
        %240 = vperm.xlu0 %239, %v222
        %v241 = vpop.permute.xlu0 %240
        %v247 = vunpack.c.l.b16 %v207
        %v248 = vunpack.c.l.b16 %v208
        %v249 = vunpack.c.l.b16 %v209
        %v250 = vunpack.c.l.b16 %v210
        %v251 = vpack.c.b16 %v248, %v247
        %v252 = vpack.c.b16 %v250, %v249
        %v261 = vunpack.c.l.b16 %v211
        %v262 = vunpack.c.l.b16 %v212
        %v263 = vunpack.c.l.b16 %v213
        %v264 = vunpack.c.l.b16 %v214
        %v265 = vunpack.c.l.b16 %v215
        %v266 = vunpack.c.l.b16 %v216
        %v267 = vunpack.c.l.b16 %v217
        %v268 = vunpack.c.l.b16 %v218
        %v269 = vpack.c.b16 %v262, %v261
        %v270 = vpack.c.b16 %v264, %v263
        %v271 = vpack.c.b16 %v266, %v265
        %v272 = vpack.c.b16 %v268, %v267
        %vm277 = vcmask 523264
        %v279 = vsel %vm277, %v251, 0
        %v282 = vsel %vm277, %v252, 0
        %284 = vmatprep.subr.bf16.mxu0 0
        %285 = vmatpush1.bf16.msra.mxu0 0
        %286 = vmatprep.subr.bf16.mxu0 0
        %287 = vmatpush1.bf16.msra.mxu0 0
        %288 = vmatprep.subr.bf16.mxu0 0
        %289 = vmatpush1.bf16.msra.mxu0 0
        %290 = vmatprep.subr.bf16.mxu0 0
        %291 = vmatpush1.bf16.msra.mxu0 0
        %292 = vmatprep.subr.bf16.mxu0 0
        %293 = vmatpush1.bf16.msra.mxu0 %v272
        %294 = vmatprep.subr.bf16.mxu0 0
        %295 = vmatpush1.bf16.msra.mxu0 %v271
        %296 = vmatprep.subr.bf16.mxu0 0
        %297 = vmatpush1.bf16.msra.mxu0 %v270
        %298 = vmatprep.subr.bf16.mxu0 0
        %299 = vmatpush1.bf16.msra.mxu0 %v269
        %300 = vmatprep.subr.bf16.mxu0 0
        %301 = vmatpush2.bf16.msra.mxu0 0
        %302 = vmatprep.subr.bf16.mxu0 0
        %303 = vmatpush2.bf16.msra.mxu0 0
        %304 = vmatprep.subr.bf16.mxu0 0
        %305 = vmatpush2.bf16.msra.mxu0 0
        %306 = vmatprep.subr.bf16.mxu0 0
        %307 = vmatpush2.bf16.msra.mxu0 0
        %308 = vmatprep.subr.bf16.mxu0 0
        %309 = vmatpush2.bf16.msra.mxu0 0
        %310 = vmatprep.subr.bf16.mxu0 0
        %311 = vmatpush2.bf16.msra.mxu0 0
        %312 = vmatprep.subr.bf16.mxu0 0
        %313 = vmatpush2.bf16.msra.mxu0 0
        %314 = vmatprep.subr.bf16.mxu0 0
        %315 = vmatpush2.bf16.msra.mxu0 0
        %316 = vmatprep.mubr.bf16.mxu0 0
        %317 = vmatmul.mubr.bf16.gmra.mxu0 %v279
        %v318 = vpop.f32.mrf.mxu0
        %v319 = vadd.f32 %v226, %v318
        %v320 = vpop.f32.mrf.mxu0
        %v321 = vpop.f32.mrf.mxu0
        %v322 = vadd.f32 %v231, %v321
        %v323 = vpop.f32.mrf.mxu0
        %324 = vmatprep.mubr.bf16.mxu0 0
        %325 = vmatmul.mubr.bf16.gmra.mxu0 %v282
        %v326 = vpop.f32.mrf.mxu0
        %v327 = vadd.f32 %v236, %v326
        %v328 = vpop.f32.mrf.mxu0
        %v329 = vpop.f32.mrf.mxu0
        %v330 = vadd.f32 %v241, %v329
        %v331 = vpop.f32.mrf.mxu0
        %332 = vdwg.mxu0
        %v333 = vand.u32 2147483647, %v319
        %vm334 = vcmp.le.f32.partialorder %v333, 0.7853982
        %vm335 = vcmp.lt.s32.totalorder %v319, 0
        %v336 = vand.u32 %v319, 2139095040
        %v337 = vshrl.u32 %v336, 23
        %v338 = vsub.s32 %v337, 127
        %v339 = vand.u32 2147483647, %v319
        %v340 = vand.u32 %v339, 8388607
        %v341 = vor.u32 %v340, 8388608
        %v342 = vsub.s32 0, %v341
        %v343 = vadd.s32 %v338, 1
        %vm344 = vcmp.gt.s32.totalorder %v343, 0
        %v345 = vsel %vm344, %v343, 0
        %v346 = vshrl.u32 %v345, 5
        %v347 = vand.u32 %v345, 31
        %v348 = vsub.s32 32, %v347
        %v349 = vshrl.u32 683565275, %v348
        %v350 = vshll.u32 683565275, %v347
        %v351 = vshrl.u32 2475754826, %v348
        %v352 = vor.u32 %v350, %v351
        %v353 = vshll.u32 2475754826, %v347
        %v354 = vshrl.u32 2131351028, %v348
        %v355 = vor.u32 %v353, %v354
        %v356 = vshll.u32 2131351028, %v347
        %v357 = vshrl.u32 2102212464, %v348
        %v358 = vor.u32 %v356, %v357
        %v359 = vshll.u32 2102212464, %v347
        %v360 = vshrl.u32 920167782, %v348
        %v361 = vor.u32 %v359, %v360
        %v362 = vshll.u32 920167782, %v347
        %v363 = vshrl.u32 1326507024, %v348
        %v364 = vor.u32 %v362, %v363
        %vm365 = vcmp.lt.s32.totalorder %v346, 1
        %vm366 = vcmp.lt.s32.totalorder %v346, 2
        %vm367 = vcmp.lt.s32.totalorder %v346, 3
        %vm368 = vcmp.lt.s32.totalorder %v346, 4
        %v369 = vsel %vm365, %v349, %v352
        %v370 = vsel %vm368, %v358, 2102212464
        %v371 = vsel %vm367, %v355, %v370
        %v372 = vsel %vm366, %v369, %v371
        %v373 = vsel %vm365, %v352, %v355
        %v374 = vsel %vm368, %v361, 920167782
        %v375 = vsel %vm367, %v358, %v374
        %v376 = vsel %vm366, %v373, %v375
        %v377 = vsel %vm365, %v355, %v358
        %v378 = vsel %vm368, %v364, 1326507024
        %v379 = vsel %vm367, %v361, %v378
        %v380 = vsel %vm366, %v377, %v379
        %v381 = vshll.u32 %v341, 8
        %v382 = vmul.u32.u64.compose %v381, %v380
        %v383 = vextract.low.u32 %v382
        %v384 = vextract.high.u32 %v382
        %v385 = vmul.u32.u64.compose %v381, %v376
        %v386 = vextract.low.u32 %v385
        %v387 = vextract.high.u32 %v385
        %v388 = vmul.u32 %v381, %v372
        %v389 = vadd.s32 %v384, %v386
        %vm390 = vc.u32 %v384, %v386
        %v391 = vadd.s32 %v387, 1
        %v392 = vsel %vm390, %v391, %v387
        %v393 = vadd.s32 %v388, %v392
        %v394 = vadd.s32 %v393, 536870912
        %v395 = vshrl.u32 %v394, 30
        %v396 = vshll.u32 %v395, 30
        %v397 = vsub.s32 %v393, %v396
        %vm398 = vcmp.lt.s32.totalorder %v397, 0
        %v399 = vsub.s32 0, %v397
        %v400 = vsel %vm398, %v399, %v397
        %v401 = vclz %v400
        %v402 = vsub.s32 %v401, 2
        %vm403 = vcmp.gt.s32.totalorder 0, %v402
        %v404 = vsel %vm403, 0, %v402
        %v405 = vsub.s32 32, %v404
        %v406 = vshll.u32 %v397, %v404
        %v407 = vshrl.u32 %v389, %v405
        %v408 = vor.u32 %v406, %v407
        %v409 = vsub.s32 4294967266, %v404
        %v410 = vadd.s32 %v409, 127
        %v411 = vshll.u32 %v410, 23
        %v412 = vor.u32 4788187, %v411
        %v413 = vand.u32 2147483647, %v412
        %v415 = vcvt.s32.f32 %v408
        %v416 = vmul.f32 %v415, %v413
        %v417 = vxor.u32 %v416, 2147483648
        %v418 = vsel %vm335, %v417, %v416
        %v419 = vsub.s32 4, %v395
        %v420 = vsel %vm335, %v419, %v395
        %v421 = vsel %vm334, %v319, %v418
        %v422 = vsel %vm334, 0, %v420
        %v423 = vcosq.f32.pop %v421
        %v424 = vsinq.f32.pop %v421
        %vm425 = vweird.f32 %v319
        %v426 = vadd.s32 %v422, 3
        %v427 = vand.u32 %v426, 3
        %vm428 = vcmp.lt.s32.totalorder %v427, 2
        %vm429 = vcmp.eq.s32.totalorder %v427, 0
        %v430 = vxor.u32 %v424, 2147483648
        %v431 = vsel %vm429, %v423, %v430
        %vm432 = vcmp.eq.s32.totalorder %v427, 2
        %v433 = vxor.u32 %v423, 2147483648
        %v434 = vsel %vm432, %v433, %v424
        %v435 = vsel %vm428, %v431, %v434
        %v436 = vsel %vm425, nan, %v435
        %v437 = vand.u32 2147483647, %v322
        %vm438 = vcmp.le.f32.partialorder %v437, 0.7853982
        %vm439 = vcmp.lt.s32.totalorder %v322, 0
        %v440 = vand.u32 %v322, 2139095040
        %v441 = vshrl.u32 %v440, 23
        %v442 = vsub.s32 %v441, 127
        %v443 = vand.u32 2147483647, %v322
        %v444 = vand.u32 %v443, 8388607
        %v445 = vor.u32 %v444, 8388608
        %v446 = vsub.s32 0, %v445
        %v447 = vadd.s32 %v442, 1
        %vm448 = vcmp.gt.s32.totalorder %v447, 0
        %v449 = vsel %vm448, %v447, 0
        %v450 = vshrl.u32 %v449, 5
        %v451 = vand.u32 %v449, 31
        %v452 = vsub.s32 32, %v451
        %v453 = vshrl.u32 683565275, %v452
        %v454 = vshll.u32 683565275, %v451
        %v455 = vshrl.u32 2475754826, %v452
        %v456 = vor.u32 %v454, %v455
        %v457 = vshll.u32 2475754826, %v451
        %v458 = vshrl.u32 2131351028, %v452
        %v459 = vor.u32 %v457, %v458
        %v460 = vshll.u32 2131351028, %v451
        %v461 = vshrl.u32 2102212464, %v452
        %v462 = vor.u32 %v460, %v461
        %v463 = vshll.u32 2102212464, %v451
        %v464 = vshrl.u32 920167782, %v452
        %v465 = vor.u32 %v463, %v464
        %v466 = vshll.u32 920167782, %v451
        %v467 = vshrl.u32 1326507024, %v452
        %v468 = vor.u32 %v466, %v467
        %vm469 = vcmp.lt.s32.totalorder %v450, 1
        %vm470 = vcmp.lt.s32.totalorder %v450, 2
        %vm471 = vcmp.lt.s32.totalorder %v450, 3
        %vm472 = vcmp.lt.s32.totalorder %v450, 4
        %v473 = vsel %vm469, %v453, %v456
        %v474 = vsel %vm472, %v462, 2102212464
        %v475 = vsel %vm471, %v459, %v474
        %v476 = vsel %vm470, %v473, %v475
        %v477 = vsel %vm469, %v456, %v459
        %v478 = vsel %vm472, %v465, 920167782
        %v479 = vsel %vm471, %v462, %v478
        %v480 = vsel %vm470, %v477, %v479
        %v481 = vsel %vm469, %v459, %v462
        %v482 = vsel %vm472, %v468, 1326507024
        %v483 = vsel %vm471, %v465, %v482
        %v484 = vsel %vm470, %v481, %v483
        %v485 = vshll.u32 %v445, 8
        %v486 = vmul.u32.u64.compose %v485, %v484
        %v487 = vextract.low.u32 %v486
        %v488 = vextract.high.u32 %v486
        %v489 = vmul.u32.u64.compose %v485, %v480
        %v490 = vextract.low.u32 %v489
        %v491 = vextract.high.u32 %v489
        %v492 = vmul.u32 %v485, %v476
        %v493 = vadd.s32 %v488, %v490
        %vm494 = vc.u32 %v488, %v490
        %v495 = vadd.s32 %v491, 1
        %v496 = vsel %vm494, %v495, %v491
        %v497 = vadd.s32 %v492, %v496
        %v498 = vadd.s32 %v497, 536870912
        %v499 = vshrl.u32 %v498, 30
        %v500 = vshll.u32 %v499, 30
        %v501 = vsub.s32 %v497, %v500
        %vm502 = vcmp.lt.s32.totalorder %v501, 0
        %v503 = vsub.s32 0, %v501
        %v504 = vsel %vm502, %v503, %v501
        %v505 = vclz %v504
        %v506 = vsub.s32 %v505, 2
        %vm507 = vcmp.gt.s32.totalorder 0, %v506
        %v508 = vsel %vm507, 0, %v506
        %v509 = vsub.s32 32, %v508
        %v510 = vshll.u32 %v501, %v508
        %v511 = vshrl.u32 %v493, %v509
        %v512 = vor.u32 %v510, %v511
        %v513 = vsub.s32 4294967266, %v508
        %v514 = vadd.s32 %v513, 127
        %v515 = vshll.u32 %v514, 23
        %v516 = vor.u32 4788187, %v515
        %v517 = vand.u32 2147483647, %v516
        %v519 = vcvt.s32.f32 %v512
        %v520 = vmul.f32 %v519, %v517
        %v521 = vxor.u32 %v520, 2147483648
        %v522 = vsel %vm439, %v521, %v520
        %v523 = vsub.s32 4, %v499
        %v524 = vsel %vm439, %v523, %v499
        %v525 = vsel %vm438, %v322, %v522
        %v526 = vsel %vm438, 0, %v524
        %v527 = vcosq.f32.pop %v525
        %v528 = vsinq.f32.pop %v525
        %vm529 = vweird.f32 %v322
        %v530 = vadd.s32 %v526, 3
        %v531 = vand.u32 %v530, 3
        %vm532 = vcmp.lt.s32.totalorder %v531, 2
        %vm533 = vcmp.eq.s32.totalorder %v531, 0
        %v534 = vxor.u32 %v528, 2147483648
        %v535 = vsel %vm533, %v527, %v534
        %vm536 = vcmp.eq.s32.totalorder %v531, 2
        %v537 = vxor.u32 %v527, 2147483648
        %v538 = vsel %vm536, %v537, %v528
        %v539 = vsel %vm532, %v535, %v538
        %v540 = vsel %vm529, nan, %v539
        %v541 = vand.u32 2147483647, %v327
        %vm542 = vcmp.le.f32.partialorder %v541, 0.7853982
        %vm543 = vcmp.lt.s32.totalorder %v327, 0
        %v544 = vand.u32 %v327, 2139095040
        %v545 = vshrl.u32 %v544, 23
        %v546 = vsub.s32 %v545, 127
        %v547 = vand.u32 2147483647, %v327
        %v548 = vand.u32 %v547, 8388607
        %v549 = vor.u32 %v548, 8388608
        %v550 = vsub.s32 0, %v549
        %v551 = vadd.s32 %v546, 1
        %vm552 = vcmp.gt.s32.totalorder %v551, 0
        %v553 = vsel %vm552, %v551, 0
        %v554 = vshrl.u32 %v553, 5
        %v555 = vand.u32 %v553, 31
        %v556 = vsub.s32 32, %v555
        %v557 = vshrl.u32 683565275, %v556
        %v558 = vshll.u32 683565275, %v555
        %v559 = vshrl.u32 2475754826, %v556
        %v560 = vor.u32 %v558, %v559
        %v561 = vshll.u32 2475754826, %v555
        %v562 = vshrl.u32 2131351028, %v556
        %v563 = vor.u32 %v561, %v562
        %v564 = vshll.u32 2131351028, %v555
        %v565 = vshrl.u32 2102212464, %v556
        %v566 = vor.u32 %v564, %v565
        %v567 = vshll.u32 2102212464, %v555
        %v568 = vshrl.u32 920167782, %v556
        %v569 = vor.u32 %v567, %v568
        %v570 = vshll.u32 920167782, %v555
        %v571 = vshrl.u32 1326507024, %v556
        %v572 = vor.u32 %v570, %v571
        %vm573 = vcmp.lt.s32.totalorder %v554, 1
        %vm574 = vcmp.lt.s32.totalorder %v554, 2
        %vm575 = vcmp.lt.s32.totalorder %v554, 3
        %vm576 = vcmp.lt.s32.totalorder %v554, 4
        %v577 = vsel %vm573, %v557, %v560
        %v578 = vsel %vm576, %v566, 2102212464
        %v579 = vsel %vm575, %v563, %v578
        %v580 = vsel %vm574, %v577, %v579
        %v581 = vsel %vm573, %v560, %v563
        %v582 = vsel %vm576, %v569, 920167782
        %v583 = vsel %vm575, %v566, %v582
        %v584 = vsel %vm574, %v581, %v583
        %v585 = vsel %vm573, %v563, %v566
        %v586 = vsel %vm576, %v572, 1326507024
        %v587 = vsel %vm575, %v569, %v586
        %v588 = vsel %vm574, %v585, %v587
        %v589 = vshll.u32 %v549, 8
        %v590 = vmul.u32.u64.compose %v589, %v588
        %v591 = vextract.low.u32 %v590
        %v592 = vextract.high.u32 %v590
        %v593 = vmul.u32.u64.compose %v589, %v584
        %v594 = vextract.low.u32 %v593
        %v595 = vextract.high.u32 %v593
        %v596 = vmul.u32 %v589, %v580
        %v597 = vadd.s32 %v592, %v594
        %vm598 = vc.u32 %v592, %v594
        %v599 = vadd.s32 %v595, 1
        %v600 = vsel %vm598, %v599, %v595
        %v601 = vadd.s32 %v596, %v600
        %v602 = vadd.s32 %v601, 536870912
        %v603 = vshrl.u32 %v602, 30
        %v604 = vshll.u32 %v603, 30
        %v605 = vsub.s32 %v601, %v604
        %vm606 = vcmp.lt.s32.totalorder %v605, 0
        %v607 = vsub.s32 0, %v605
        %v608 = vsel %vm606, %v607, %v605
        %v609 = vclz %v608
        %v610 = vsub.s32 %v609, 2
        %vm611 = vcmp.gt.s32.totalorder 0, %v610
        %v612 = vsel %vm611, 0, %v610
        %v613 = vsub.s32 32, %v612
        %v614 = vshll.u32 %v605, %v612
        %v615 = vshrl.u32 %v597, %v613
        %v616 = vor.u32 %v614, %v615
        %v617 = vsub.s32 4294967266, %v612
        %v618 = vadd.s32 %v617, 127
        %v619 = vshll.u32 %v618, 23
        %v620 = vor.u32 4788187, %v619
        %v621 = vand.u32 2147483647, %v620
        %v623 = vcvt.s32.f32 %v616
        %v624 = vmul.f32 %v623, %v621
        %v625 = vxor.u32 %v624, 2147483648
        %v626 = vsel %vm543, %v625, %v624
        %v627 = vsub.s32 4, %v603
        %v628 = vsel %vm543, %v627, %v603
        %v629 = vsel %vm542, %v327, %v626
        %v630 = vsel %vm542, 0, %v628
        %v631 = vcosq.f32.pop %v629
        %v632 = vsinq.f32.pop %v629
        %vm633 = vweird.f32 %v327
        %v634 = vadd.s32 %v630, 3
        %v635 = vand.u32 %v634, 3
        %vm636 = vcmp.lt.s32.totalorder %v635, 2
        %vm637 = vcmp.eq.s32.totalorder %v635, 0
        %v638 = vxor.u32 %v632, 2147483648
        %v639 = vsel %vm637, %v631, %v638
        %vm640 = vcmp.eq.s32.totalorder %v635, 2
        %v641 = vxor.u32 %v631, 2147483648
        %v642 = vsel %vm640, %v641, %v632
        %v643 = vsel %vm636, %v639, %v642
        %v644 = vsel %vm633, nan, %v643
        %v645 = vand.u32 2147483647, %v330
        %vm646 = vcmp.le.f32.partialorder %v645, 0.7853982
        %vm647 = vcmp.lt.s32.totalorder %v330, 0
        %v648 = vand.u32 %v330, 2139095040
        %v649 = vshrl.u32 %v648, 23
        %v650 = vsub.s32 %v649, 127
        %v651 = vand.u32 2147483647, %v330
        %v652 = vand.u32 %v651, 8388607
        %v653 = vor.u32 %v652, 8388608
        %v654 = vsub.s32 0, %v653
        %v655 = vadd.s32 %v650, 1
        %vm656 = vcmp.gt.s32.totalorder %v655, 0
        %v657 = vsel %vm656, %v655, 0
        %v658 = vshrl.u32 %v657, 5
        %v659 = vand.u32 %v657, 31
        %v660 = vsub.s32 32, %v659
        %v661 = vshrl.u32 683565275, %v660
        %v662 = vshll.u32 683565275, %v659
        %v663 = vshrl.u32 2475754826, %v660
        %v664 = vor.u32 %v662, %v663
        %v665 = vshll.u32 2475754826, %v659
        %v666 = vshrl.u32 2131351028, %v660
        %v667 = vor.u32 %v665, %v666
        %v668 = vshll.u32 2131351028, %v659
        %v669 = vshrl.u32 2102212464, %v660
        %v670 = vor.u32 %v668, %v669
        %v671 = vshll.u32 2102212464, %v659
        %v672 = vshrl.u32 920167782, %v660
        %v673 = vor.u32 %v671, %v672
        %v674 = vshll.u32 920167782, %v659
        %v675 = vshrl.u32 1326507024, %v660
        %v676 = vor.u32 %v674, %v675
        %vm677 = vcmp.lt.s32.totalorder %v658, 1
        %vm678 = vcmp.lt.s32.totalorder %v658, 2
        %vm679 = vcmp.lt.s32.totalorder %v658, 3
        %vm680 = vcmp.lt.s32.totalorder %v658, 4
        %v681 = vsel %vm677, %v661, %v664
        %v682 = vsel %vm680, %v670, 2102212464
        %v683 = vsel %vm679, %v667, %v682
        %v684 = vsel %vm678, %v681, %v683
        %v685 = vsel %vm677, %v664, %v667
        %v686 = vsel %vm680, %v673, 920167782
        %v687 = vsel %vm679, %v670, %v686
        %v688 = vsel %vm678, %v685, %v687
        %v689 = vsel %vm677, %v667, %v670
        %v690 = vsel %vm680, %v676, 1326507024
        %v691 = vsel %vm679, %v673, %v690
        %v692 = vsel %vm678, %v689, %v691
        %v693 = vshll.u32 %v653, 8
        %v694 = vmul.u32.u64.compose %v693, %v692
        %v695 = vextract.low.u32 %v694
        %v696 = vextract.high.u32 %v694
        %v697 = vmul.u32.u64.compose %v693, %v688
        %v698 = vextract.low.u32 %v697
        %v699 = vextract.high.u32 %v697
        %v700 = vmul.u32 %v693, %v684
        %v701 = vadd.s32 %v696, %v698
        %vm702 = vc.u32 %v696, %v698
        %v703 = vadd.s32 %v699, 1
        %v704 = vsel %vm702, %v703, %v699
        %v705 = vadd.s32 %v700, %v704
        %v706 = vadd.s32 %v705, 536870912
        %v707 = vshrl.u32 %v706, 30
        %v708 = vshll.u32 %v707, 30
        %v709 = vsub.s32 %v705, %v708
        %vm710 = vcmp.lt.s32.totalorder %v709, 0
        %v711 = vsub.s32 0, %v709
        %v712 = vsel %vm710, %v711, %v709
        %v713 = vclz %v712
        %v714 = vsub.s32 %v713, 2
        %vm715 = vcmp.gt.s32.totalorder 0, %v714
        %v716 = vsel %vm715, 0, %v714
        %v717 = vsub.s32 32, %v716
        %v718 = vshll.u32 %v709, %v716
        %v719 = vshrl.u32 %v701, %v717
        %v720 = vor.u32 %v718, %v719
        %v721 = vsub.s32 4294967266, %v716
        %v722 = vadd.s32 %v721, 127
        %v723 = vshll.u32 %v722, 23
        %v724 = vor.u32 4788187, %v723
        %v725 = vand.u32 2147483647, %v724
        %v727 = vcvt.s32.f32 %v720
        %v728 = vmul.f32 %v727, %v725
        %v729 = vxor.u32 %v728, 2147483648
        %v730 = vsel %vm647, %v729, %v728
        %v731 = vsub.s32 4, %v707
        %v732 = vsel %vm647, %v731, %v707
        %v733 = vsel %vm646, %v330, %v730
        %v734 = vsel %vm646, 0, %v732
        %v735 = vcosq.f32.pop %v733
        %v736 = vsinq.f32.pop %v733
        %vm737 = vweird.f32 %v330
        %v738 = vadd.s32 %v734, 3
        %v739 = vand.u32 %v738, 3
        %vm740 = vcmp.lt.s32.totalorder %v739, 2
        %vm741 = vcmp.eq.s32.totalorder %v739, 0
        %v742 = vxor.u32 %v736, 2147483648
        %v743 = vsel %vm741, %v735, %v742
        %vm744 = vcmp.eq.s32.totalorder %v739, 2
        %v745 = vxor.u32 %v735, 2147483648
        %v746 = vsel %vm744, %v745, %v736
        %v747 = vsel %vm740, %v743, %v746
        %v748 = vsel %vm737, nan, %v747
        %v749 = vpack.c.bf16 %v540, %v436
        %v750 = vpack.c.bf16 %v748, %v644
        %v753 = vunpack.c.l.b16 %v749
        %v754 = vunpack.c.h.b16 %v749
        %v755 = vunpack.c.l.b16 %v750
        %v756 = vunpack.c.h.b16 %v750
        %v757 = vpack.c.b16 %v753, %v753
        %v758 = vpack.c.b16 %v754, %v754
        %v759 = vpack.c.b16 %v755, %v755
        %v760 = vpack.c.b16 %v756, %v756
        %765 = vst [vmem:[%s205] sm:$0xf] %v757
        %766 = vst [vmem:[%s205 + $0x4] sm:$0xf] %v758
        %767 = vst [vmem:[%s205 + $0x8] sm:$0xf] %v759
        %768 = vst [vmem:[%s205 + $0xc] sm:$0xf] %v760
        %s769 = sand.u32 %s112, 1
        %s770 = scalar_lea.sflag [#allocation4], %s769
        %s771 = sand.u32 %s112, 1
        %s772 = smul.addr %s771, 16
        %s773 = scalar_lea.vmem [#allocation5], %s772
        // Predicated region
        $region37: #{tpu_custom_call.1} parent=31 // pred_check
          %p774 = pneg %p122
        $region38: #{tpu_custom_call.1} parent=31 // pred_check_branch
          %776 = sbr.rel (%p774) target = $region40
        $region39: #{tpu_custom_call.1} parent=31 // pred_region
          %s778 = ssub.s32 256, 256
          %779 = vsyncadd %s770, %s778
          %s780 = smul.addr %s24, 4
          %s781 = sadd.s32 %s25, %s780
          %s782 = smul.addr %s781, 64
          %s783 = scalar_lea.hbm %s3, %s782
          %s784 = sshll.u32 %s773, 4
          %s785 = int_to_ptr.vmem [resolvable:$true] %s784
          %790 = dma.vmem_to_hbm [thread:$0]  %s785, 256, %s783, %s770, 64, 64, 4
        $region40: #{tpu_custom_call.1} parent=31 // pred_fallthru
          _
      $region32: #{tpu_custom_call.1} parent=5 // pred_fallthru
        _
      %p791 = scmp.le.s32.totalorder 2, %s15
      // Predicated region
      $region41: #{tpu_custom_call.1} parent=5 // pred_check
        %p792 = pneg %p791
      $region42: #{tpu_custom_call.1} parent=5 // pred_check_branch
        %794 = sbr.rel (%p792) target = $region44
      $region43: #{tpu_custom_call.1} parent=5 // pred_region
        %s795 = ssub.s32 %s15, 2
        // Predicated region
        $region45: #{tpu_custom_call.1} parent=43 // pred_check
          %p796 = pneg %p128
        $region46: #{tpu_custom_call.1} parent=43 // pred_check_branch
          %798 = sbr.rel (%p796) target = $region48
        $region47: #{tpu_custom_call.1} parent=43 // pred_region
          %s799 = sand.u32 %s113, 1
          %s800 = scalar_lea.sflag [#allocation4], %s799
          %s801 = sand.u32 %s113, 1
          %s802 = smul.addr %s801, 16
          %s803 = scalar_lea.vmem [#allocation5], %s802
          %804 = dma.done %s800, 256
        $region48: #{tpu_custom_call.1} parent=43 // pred_fallthru
          _
      $region44: #{tpu_custom_call.1} parent=5 // pred_fallthru
        _
    $region6: #{tpu_custom_call.1} parent=1 // loop_footer
      %s19 = sadd.s32 1, %s15
    $region7: #{tpu_custom_call.1} parent=1 // loop_footer_branch
      %14 = sbr.rel target = $region3
    $region8: #{tpu_custom_call.1} parent=1 // loop_exit
      _
    %805 = vsyncpa [#allocation3], 1
    %s806 = scalar_lea.sflag [#allocation3], 1
    %807 = vsyncpa %s806, 1
    %808 = vsyncpa [#allocation4], 1
    %s809 = scalar_lea.sflag [#allocation4], 1
    %810 = vsyncpa %s809, 1

</llo_original>
